<compile_context>
chip_gen: v5e
topology: v5e:2x2
jax: 0.10.0
libtpu: 0.0.40
codegen_flags: <defaults>
</compile_context>

<pallas_src>
import functools

import numpy as np
import jax
import jax.numpy as jnp
from jax import lax
from jax.experimental import pallas as pl
from jax.experimental.pallas import tpu as pltpu

# Parameter order mirrors the PyTorch module's __init__.
PARAM_NAMES = [
    "f_0", "f_c", "k", "n", "d_p", "evap", "evap_constant",
    "missing_restrict", "missing", "w_r_1", "w_r_2", "w_z_1", "w_z_2",
    "w_1", "w_2",
]
PARAM_INIT = np.array(
    [0.9, 0.5, 0.2, 0.9, 0.0001, 0.29, 0.02, 2.0, 0.2,
     1.0, 1.0, 1.0, 1.0, 1.0, 1.0], dtype=np.float32)


def runflow_kernel(x_vmem, scal_smem, params, out_ref, *, T, use_gru):
    # params (SMEM, (15,)) — see PARAM_NAMES.
    f_0 = params[0]
    f_c = params[1]
    k = params[2]
    n = params[3]
    d_p = params[4]
    evap = params[5]
    evap_c = params[6]
    mr = params[7]
    missing = params[8]
    w_r1 = params[9]
    w_r2 = params[10]
    w_z1 = params[11]
    w_z2 = params[12]
    # w_1 / w_2 (params[13], params[14]) are unused in the PyTorch forward.

    x = x_vmem[...]                        # (9, T_pad) feature-major
    Tp = x.shape[1]
    greenland = x[0:1, :]
    impervious = x[2:3, :]
    area = x[3:4, :]
    slope = x[4:5, :]
    prec = x[6:7, :]
    total_prec = x[7:8, :]

    lanes = lax.broadcasted_iota(jnp.int32, (1, Tp), 1)

    # scal_smem layout: [0:Tp] = prec (padded), [Tp] = total_prec[0],
    # [Tp+1] = area_id.

    # ---- sequential rainfall carry-over recurrence ------------------------
    # prec_pre[0] = total_prec[0] - prec[0]; elements 1..T-1 are overwritten.
    # T is a static Python int, so the scalar chain is fully unrolled; the
    # lane inserts ride the VPU off the critical (scalar) dependency chain.
    p_vec = total_prec - prec
    prev = scal_smem[Tp] - scal_smem[0]
    for i in range(1, T):
        last = jnp.where(prev > mr, mr + (prev - mr) * missing, prev)
        new = (last + scal_smem[i - 1]) * (1.0 - evap) - evap_c
        p_vec = jnp.where(lanes == i, new, p_vec)
        prev = new
    prec_pre = jnp.maximum(p_vec, 0.0)                          # ReLU

    # ---- vectorized runoff physics (VPU/EUP elementwise hot path) ---------
    greenland_area = greenland * area
    f_t = (f_0 - f_c) * jnp.exp(-(k * total_prec)) + f_c
    q_green = jnp.maximum(prec_pre * (1.0 / 1000.0) * greenland_area
                          * (1.0 - f_t), 0.0)

    impervious_area = impervious * area
    d_imp = jnp.maximum(prec_pre * (1.0 / 1000.0) - d_p, 0.0)
    # d_imp ** (5/3) with a zero guard: padded / dry lanes stay exactly 0.
    d_pow = jnp.where(
        d_imp > 0.0,
        jnp.exp((5.0 / 3.0) * jnp.log(jnp.maximum(d_imp, 1e-30))),
        0.0)
    q_imp = jnp.maximum(jnp.sqrt(impervious_area) * (1.49 / n)
                        * d_pow * jnp.sqrt(slope), 0.0)

    q = q_imp + q_green                                         # (1, T_pad)
    q = jnp.where(lanes < T, q, 0.0)     # padded-lane insurance before shift

    # ---- data-dependent time shift: 1 leading zero vs 4 leading zeros -----
    area_id = scal_smem[Tp + 1]
    rid = jnp.round(area_id)
    is_special = jnp.logical_or(rid == 3723.0, rid == 870.0)
    q1 = jnp.where(lanes < 1, 0.0, pltpu.roll(q, shift=1, axis=1))
    q4 = jnp.where(lanes < 4, 0.0, pltpu.roll(q, shift=4, axis=1))
    q_shift = jnp.where(is_special, q1, q4)

    if use_gru:
        # h_0 = 0 ; h_i = h_{i-1}*w_r1 + q[i]*w_r2 ;
        # q2_0 = q[0] ; q2_i = h_i*w_z1 + q[i]*w_z2
        # Closed form: h_i = sum_{1<=j<=i} w_r1^{i-j} * (w_r2 * q[j]).
        # Evaluate with a Kogge-Stone log-depth scan on the lane vector;
        # the per-step gains w_r1^(2^s) are built by repeated squaring so
        # w_r1 <= 0 remains valid.
        b = jnp.where(lanes == 0, 0.0, w_r2 * q_shift)
        h = b
        gain = w_r1
        d = 1
        n_steps = max(1, (T - 1).bit_length())   # window >= T lanes
        for _ in range(n_steps):
            shifted = jnp.where(lanes < d, 0.0,
                                pltpu.roll(h, shift=d, axis=1))
            h = h + gain * shifted
            gain = gain * gain
            d *= 2
        q2 = w_z1 * h + w_z2 * q_shift
        out_ref[...] = jnp.where(lanes == 0, q_shift, q2)
    else:
        out_ref[...] = q_shift


def runflow_forward(x, params, epoch, interval_epoch):
    """x: (T, 9) float32, params: (15,) float32. Returns (T, 1, 1) float32."""
    T = x.shape[0]
    assert T <= 128, "kernel uses a single 128-lane tile for the time axis"
    T_pad = 128
    xf = jnp.asarray(x, jnp.float32)
    xt = jnp.zeros((9, T_pad), jnp.float32).at[:, :T].set(xf.T)
    # Small SMEM scalar side-channel: prec (padded), total_prec[0], area_id.
    scal = jnp.zeros((T_pad + 2,), jnp.float32)
    scal = scal.at[:T].set(xf[:, 6])
    scal = scal.at[T_pad].set(xf[0, 7])
    scal = scal.at[T_pad + 1].set(xf[0, 8])
    use_gru = bool(epoch > interval_epoch)   # static (Python) in PyTorch too

    kern = functools.partial(runflow_kernel, T=T, use_gru=use_gru)
    out = pl.pallas_call(
        kern,
        out_shape=jax.ShapeDtypeStruct((1, T_pad), jnp.float32),
        in_specs=[
            pl.BlockSpec(memory_space=pltpu.MemorySpace.VMEM),   # (9,128) x
            pl.BlockSpec(memory_space=pltpu.MemorySpace.SMEM),   # scalars
            pl.BlockSpec(memory_space=pltpu.MemorySpace.SMEM),   # params
        ],
        out_specs=pl.BlockSpec(memory_space=pltpu.MemorySpace.VMEM),
    )(xt, scal, jnp.asarray(params, jnp.float32))
    return out[0, :T].reshape(T, 1, 1)


# ---------------- pure NumPy reference (mirrors the PyTorch forward) --------
def runflow_ref(x, params, epoch, interval_epoch):
    x = np.asarray(x, np.float64)
    p = dict(zip(PARAM_NAMES, np.asarray(params, np.float64)))
    T = x.shape[0]
    greenland, impervious, area, slope = x[:, 0], x[:, 2], x[:, 3], x[:, 4]
    prec, total_prec = x[:, 6], x[:, 7]
    area_id = x[0, 8]

    prec_pre = (total_prec - prec).copy()
    for i in range(1, T):
        last = prec_pre[i - 1]
        if last > p["missing_restrict"]:
            last = p["missing_restrict"] + (last - p["missing_restrict"]) * p["missing"]
        prec_pre[i] = (last + prec[i - 1]) * (1 - p["evap"]) - p["evap_constant"]
    prec_pre = np.maximum(prec_pre, 0.0)

    greenland_area = greenland * area
    f_t = (p["f_0"] - p["f_c"]) * np.e ** (-(p["k"] * total_prec)) + p["f_c"]
    q_green = np.maximum(prec_pre / 1000 * greenland_area * (1 - f_t), 0.0)
    impervious_area = impervious * area
    d_imp = np.maximum(prec_pre / 1000 - p["d_p"], 0.0)
    q_imp = np.maximum(
        np.sqrt(impervious_area) * (1.49 / p["n"]) * d_imp ** (5 / 3) * np.sqrt(slope),
        0.0)
    q = (q_imp + q_green).reshape(T, 1, 1)

    shift = 1 if str(round(float(area_id))) in ("3723", "870") else 4
    for _ in range(shift):
        q = np.concatenate([np.zeros((1, 1, 1)), q[:-1]], axis=0)

    if epoch > interval_epoch:
        h = 0.0
        q2 = q.copy()
        for i in range(1, T):
            h = h * p["w_r_1"] + q[i, 0, 0] * p["w_r_2"]
            q2[i, 0, 0] = h * p["w_z_1"] + q[i, 0, 0] * p["w_z_2"]
        return q2
    return q


if __name__ == "__main__":
    T = 8
    key = jax.random.PRNGKey(0)
    x_base = jax.random.uniform(key, (T, 9), jnp.float32, minval=0.1, maxval=3.0)
    params = jnp.asarray(PARAM_INIT)
    interval_epoch = 5

    for area_id in (1234.0, 870.0):       # "else" (4-shift) and special (1-shift)
        x = x_base.at[:, 8].set(area_id)
        for epoch in (3, 10):              # plain-q path and GRU path
            out = runflow_forward(x, params, epoch, interval_epoch)
            out = jax.block_until_ready(out)
            ref = runflow_ref(np.asarray(x), np.asarray(params),
                              epoch, interval_epoch)
            np.testing.assert_allclose(np.asarray(out), ref,
                                       rtol=2e-3, atol=1e-5)

    print("KERNEL_OK")
</pallas_src>

<mosaic_0001>
module attributes {stable_mosaic.version = 11 : i64} {
  func.func @runflow_kernel(%arg0: memref<9x128xf32, #tpu.memory_space<vmem>>, %arg1: memref<130xf32, #tpu.memory_space<smem>>, %arg2: memref<15xf32, #tpu.memory_space<smem>>, %arg3: memref<1x128xf32, #tpu.memory_space<vmem>>) attributes {dimension_semantics = [], scalar_prefetch = 0 : i64, scratch_operands = 0 : i64, tpu.core_type = #tpu.core_type<tc>} {
    %c0 = arith.constant 0 : index
    %0 = memref.load %arg2[%c0] : memref<15xf32, #tpu.memory_space<smem>>
    %c1 = arith.constant 1 : index
    %1 = memref.load %arg2[%c1] : memref<15xf32, #tpu.memory_space<smem>>
    %c2 = arith.constant 2 : index
    %2 = memref.load %arg2[%c2] : memref<15xf32, #tpu.memory_space<smem>>
    %c3 = arith.constant 3 : index
    %3 = memref.load %arg2[%c3] : memref<15xf32, #tpu.memory_space<smem>>
    %c4 = arith.constant 4 : index
    %4 = memref.load %arg2[%c4] : memref<15xf32, #tpu.memory_space<smem>>
    %c5 = arith.constant 5 : index
    %5 = memref.load %arg2[%c5] : memref<15xf32, #tpu.memory_space<smem>>
    %c6 = arith.constant 6 : index
    %6 = memref.load %arg2[%c6] : memref<15xf32, #tpu.memory_space<smem>>
    %c7 = arith.constant 7 : index
    %7 = memref.load %arg2[%c7] : memref<15xf32, #tpu.memory_space<smem>>
    %c8 = arith.constant 8 : index
    %8 = memref.load %arg2[%c8] : memref<15xf32, #tpu.memory_space<smem>>
    %c0_0 = arith.constant 0 : index
    %c0_1 = arith.constant 0 : index
    %9 = vector.load %arg0[%c0_0, %c0_1] : memref<9x128xf32, #tpu.memory_space<vmem>>, vector<9x128xf32>
    %10 = vector.extract_strided_slice %9 {offsets = [0, 0], sizes = [1, 128], strides = [1, 1]} : vector<9x128xf32> to vector<1x128xf32>
    %11 = vector.extract_strided_slice %9 {offsets = [2, 0], sizes = [1, 128], strides = [1, 1]} : vector<9x128xf32> to vector<1x128xf32>
    %12 = vector.extract_strided_slice %9 {offsets = [3, 0], sizes = [1, 128], strides = [1, 1]} : vector<9x128xf32> to vector<1x128xf32>
    %13 = vector.extract_strided_slice %9 {offsets = [4, 0], sizes = [1, 128], strides = [1, 1]} : vector<9x128xf32> to vector<1x128xf32>
    %14 = vector.extract_strided_slice %9 {offsets = [6, 0], sizes = [1, 128], strides = [1, 1]} : vector<9x128xf32> to vector<1x128xf32>
    %15 = vector.extract_strided_slice %9 {offsets = [7, 0], sizes = [1, 128], strides = [1, 1]} : vector<9x128xf32> to vector<1x128xf32>
    %16 = tpu.iota {dimensions = array<i32: 1>} : vector<1x128xi32>
    %17 = arith.subf %15, %14 : vector<1x128xf32>
    %c128 = arith.constant 128 : index
    %18 = memref.load %arg1[%c128] : memref<130xf32, #tpu.memory_space<smem>>
    %c0_2 = arith.constant 0 : index
    %19 = memref.load %arg1[%c0_2] : memref<130xf32, #tpu.memory_space<smem>>
    %20 = arith.subf %18, %19 : f32
    %21 = arith.cmpf ogt, %20, %7 : f32
    %22 = arith.subf %20, %7 : f32
    %23 = arith.mulf %22, %8 : f32
    %24 = arith.addf %7, %23 : f32
    %25 = arith.select %21, %24, %20 : f32
    %c0_3 = arith.constant 0 : index
    %26 = memref.load %arg1[%c0_3] : memref<130xf32, #tpu.memory_space<smem>>
    %27 = arith.addf %25, %26 : f32
    %cst = arith.constant 1.000000e+00 : f32
    %28 = arith.subf %cst, %5 : f32
    %29 = arith.mulf %27, %28 : f32
    %30 = arith.subf %29, %6 : f32
    %c1_i32 = arith.constant 1 : i32
    %31 = vector.broadcast %c1_i32 : i32 to vector<1x128xi32>
    %32 = arith.cmpi eq, %16, %31 : vector<1x128xi32>
    %33 = vector.broadcast %30 : f32 to vector<1x128xf32>
    %34 = arith.select %32, %33, %17 : vector<1x128xi1>, vector<1x128xf32>
    %35 = arith.cmpf ogt, %30, %7 : f32
    %36 = arith.subf %30, %7 : f32
    %37 = arith.mulf %36, %8 : f32
    %38 = arith.addf %7, %37 : f32
    %39 = arith.select %35, %38, %30 : f32
    %c1_4 = arith.constant 1 : index
    %40 = memref.load %arg1[%c1_4] : memref<130xf32, #tpu.memory_space<smem>>
    %41 = arith.addf %39, %40 : f32
    %cst_5 = arith.constant 1.000000e+00 : f32
    %42 = arith.subf %cst_5, %5 : f32
    %43 = arith.mulf %41, %42 : f32
    %44 = arith.subf %43, %6 : f32
    %c2_i32 = arith.constant 2 : i32
    %45 = vector.broadcast %c2_i32 : i32 to vector<1x128xi32>
    %46 = arith.cmpi eq, %16, %45 : vector<1x128xi32>
    %47 = vector.broadcast %44 : f32 to vector<1x128xf32>
    %48 = arith.select %46, %47, %34 : vector<1x128xi1>, vector<1x128xf32>
    %49 = arith.cmpf ogt, %44, %7 : f32
    %50 = arith.subf %44, %7 : f32
    %51 = arith.mulf %50, %8 : f32
    %52 = arith.addf %7, %51 : f32
    %53 = arith.select %49, %52, %44 : f32
    %c2_6 = arith.constant 2 : index
    %54 = memref.load %arg1[%c2_6] : memref<130xf32, #tpu.memory_space<smem>>
    %55 = arith.addf %53, %54 : f32
    %cst_7 = arith.constant 1.000000e+00 : f32
    %56 = arith.subf %cst_7, %5 : f32
    %57 = arith.mulf %55, %56 : f32
    %58 = arith.subf %57, %6 : f32
    %c3_i32 = arith.constant 3 : i32
    %59 = vector.broadcast %c3_i32 : i32 to vector<1x128xi32>
    %60 = arith.cmpi eq, %16, %59 : vector<1x128xi32>
    %61 = vector.broadcast %58 : f32 to vector<1x128xf32>
    %62 = arith.select %60, %61, %48 : vector<1x128xi1>, vector<1x128xf32>
    %63 = arith.cmpf ogt, %58, %7 : f32
    %64 = arith.subf %58, %7 : f32
    %65 = arith.mulf %64, %8 : f32
    %66 = arith.addf %7, %65 : f32
    %67 = arith.select %63, %66, %58 : f32
    %c3_8 = arith.constant 3 : index
    %68 = memref.load %arg1[%c3_8] : memref<130xf32, #tpu.memory_space<smem>>
    %69 = arith.addf %67, %68 : f32
    %cst_9 = arith.constant 1.000000e+00 : f32
    %70 = arith.subf %cst_9, %5 : f32
    %71 = arith.mulf %69, %70 : f32
    %72 = arith.subf %71, %6 : f32
    %c4_i32 = arith.constant 4 : i32
    %73 = vector.broadcast %c4_i32 : i32 to vector<1x128xi32>
    %74 = arith.cmpi eq, %16, %73 : vector<1x128xi32>
    %75 = vector.broadcast %72 : f32 to vector<1x128xf32>
    %76 = arith.select %74, %75, %62 : vector<1x128xi1>, vector<1x128xf32>
    %77 = arith.cmpf ogt, %72, %7 : f32
    %78 = arith.subf %72, %7 : f32
    %79 = arith.mulf %78, %8 : f32
    %80 = arith.addf %7, %79 : f32
    %81 = arith.select %77, %80, %72 : f32
    %c4_10 = arith.constant 4 : index
    %82 = memref.load %arg1[%c4_10] : memref<130xf32, #tpu.memory_space<smem>>
    %83 = arith.addf %81, %82 : f32
    %cst_11 = arith.constant 1.000000e+00 : f32
    %84 = arith.subf %cst_11, %5 : f32
    %85 = arith.mulf %83, %84 : f32
    %86 = arith.subf %85, %6 : f32
    %c5_i32 = arith.constant 5 : i32
    %87 = vector.broadcast %c5_i32 : i32 to vector<1x128xi32>
    %88 = arith.cmpi eq, %16, %87 : vector<1x128xi32>
    %89 = vector.broadcast %86 : f32 to vector<1x128xf32>
    %90 = arith.select %88, %89, %76 : vector<1x128xi1>, vector<1x128xf32>
    %91 = arith.cmpf ogt, %86, %7 : f32
    %92 = arith.subf %86, %7 : f32
    %93 = arith.mulf %92, %8 : f32
    %94 = arith.addf %7, %93 : f32
    %95 = arith.select %91, %94, %86 : f32
    %c5_12 = arith.constant 5 : index
    %96 = memref.load %arg1[%c5_12] : memref<130xf32, #tpu.memory_space<smem>>
    %97 = arith.addf %95, %96 : f32
    %cst_13 = arith.constant 1.000000e+00 : f32
    %98 = arith.subf %cst_13, %5 : f32
    %99 = arith.mulf %97, %98 : f32
    %100 = arith.subf %99, %6 : f32
    %c6_i32 = arith.constant 6 : i32
    %101 = vector.broadcast %c6_i32 : i32 to vector<1x128xi32>
    %102 = arith.cmpi eq, %16, %101 : vector<1x128xi32>
    %103 = vector.broadcast %100 : f32 to vector<1x128xf32>
    %104 = arith.select %102, %103, %90 : vector<1x128xi1>, vector<1x128xf32>
    %105 = arith.cmpf ogt, %100, %7 : f32
    %106 = arith.subf %100, %7 : f32
    %107 = arith.mulf %106, %8 : f32
    %108 = arith.addf %7, %107 : f32
    %109 = arith.select %105, %108, %100 : f32
    %c6_14 = arith.constant 6 : index
    %110 = memref.load %arg1[%c6_14] : memref<130xf32, #tpu.memory_space<smem>>
    %111 = arith.addf %109, %110 : f32
    %cst_15 = arith.constant 1.000000e+00 : f32
    %112 = arith.subf %cst_15, %5 : f32
    %113 = arith.mulf %111, %112 : f32
    %114 = arith.subf %113, %6 : f32
    %c7_i32 = arith.constant 7 : i32
    %115 = vector.broadcast %c7_i32 : i32 to vector<1x128xi32>
    %116 = arith.cmpi eq, %16, %115 : vector<1x128xi32>
    %117 = vector.broadcast %114 : f32 to vector<1x128xf32>
    %118 = arith.select %116, %117, %104 : vector<1x128xi1>, vector<1x128xf32>
    %cst_16 = arith.constant 0.000000e+00 : f32
    %119 = vector.broadcast %cst_16 : f32 to vector<1x128xf32>
    %120 = arith.maximumf %118, %119 : vector<1x128xf32>
    %121 = arith.mulf %10, %12 : vector<1x128xf32>
    %122 = arith.subf %0, %1 : f32
    %123 = vector.broadcast %2 : f32 to vector<1x128xf32>
    %124 = arith.mulf %123, %15 : vector<1x128xf32>
    %cst_17 = arith.constant 0.000000e+00 : f32
    %125 = vector.broadcast %cst_17 : f32 to vector<1x128xf32>
    %126 = arith.subf %125, %124 : vector<1x128xf32>
    %127 = math.exp %126 : vector<1x128xf32>
    %128 = vector.broadcast %122 : f32 to vector<1x128xf32>
    %129 = arith.mulf %128, %127 : vector<1x128xf32>
    %130 = vector.broadcast %1 : f32 to vector<1x128xf32>
    %131 = arith.addf %129, %130 : vector<1x128xf32>
    %cst_18 = arith.constant 1.000000e-03 : f32
    %132 = vector.broadcast %cst_18 : f32 to vector<1x128xf32>
    %133 = arith.mulf %120, %132 : vector<1x128xf32>
    %134 = arith.mulf %133, %121 : vector<1x128xf32>
    %cst_19 = arith.constant 1.000000e+00 : f32
    %135 = vector.broadcast %cst_19 : f32 to vector<1x128xf32>
    %136 = arith.subf %135, %131 : vector<1x128xf32>
    %137 = arith.mulf %134, %136 : vector<1x128xf32>
    %cst_20 = arith.constant 0.000000e+00 : f32
    %138 = vector.broadcast %cst_20 : f32 to vector<1x128xf32>
    %139 = arith.maximumf %137, %138 : vector<1x128xf32>
    %140 = arith.mulf %11, %12 : vector<1x128xf32>
    %cst_21 = arith.constant 1.000000e-03 : f32
    %141 = vector.broadcast %cst_21 : f32 to vector<1x128xf32>
    %142 = arith.mulf %120, %141 : vector<1x128xf32>
    %143 = vector.broadcast %4 : f32 to vector<1x128xf32>
    %144 = arith.subf %142, %143 : vector<1x128xf32>
    %cst_22 = arith.constant 0.000000e+00 : f32
    %145 = vector.broadcast %cst_22 : f32 to vector<1x128xf32>
    %146 = arith.maximumf %144, %145 : vector<1x128xf32>
    %cst_23 = arith.constant 0.000000e+00 : f32
    %147 = vector.broadcast %cst_23 : f32 to vector<1x128xf32>
    %148 = arith.cmpf ogt, %146, %147 : vector<1x128xf32>
    %cst_24 = arith.constant 1.000000e-30 : f32
    %149 = vector.broadcast %cst_24 : f32 to vector<1x128xf32>
    %150 = arith.maximumf %146, %149 : vector<1x128xf32>
    %151 = math.log %150 : vector<1x128xf32>
    %cst_25 = arith.constant 1.66666663 : f32
    %152 = vector.broadcast %cst_25 : f32 to vector<1x128xf32>
    %153 = arith.mulf %152, %151 : vector<1x128xf32>
    %154 = math.exp %153 : vector<1x128xf32>
    %cst_26 = arith.constant 0.000000e+00 : f32
    %155 = vector.broadcast %cst_26 : f32 to vector<1x128xf32>
    %156 = arith.select %148, %154, %155 : vector<1x128xi1>, vector<1x128xf32>
    %157 = math.sqrt %140 : vector<1x128xf32>
    %cst_27 = arith.constant 1.490000e+00 : f32
    %158 = arith.divf %cst_27, %3 : f32
    %159 = vector.broadcast %158 : f32 to vector<1x128xf32>
    %160 = arith.mulf %157, %159 : vector<1x128xf32>
    %161 = arith.mulf %160, %156 : vector<1x128xf32>
    %162 = math.sqrt %13 : vector<1x128xf32>
    %163 = arith.mulf %161, %162 : vector<1x128xf32>
    %cst_28 = arith.constant 0.000000e+00 : f32
    %164 = vector.broadcast %cst_28 : f32 to vector<1x128xf32>
    %165 = arith.maximumf %163, %164 : vector<1x128xf32>
    %166 = arith.addf %165, %139 : vector<1x128xf32>
    %c8_i32 = arith.constant 8 : i32
    %167 = vector.broadcast %c8_i32 : i32 to vector<1x128xi32>
    %168 = arith.cmpi slt, %16, %167 : vector<1x128xi32>
    %cst_29 = arith.constant 0.000000e+00 : f32
    %169 = vector.broadcast %cst_29 : f32 to vector<1x128xf32>
    %170 = arith.select %168, %166, %169 : vector<1x128xi1>, vector<1x128xf32>
    %c129 = arith.constant 129 : index
    %171 = memref.load %arg1[%c129] : memref<130xf32, #tpu.memory_space<smem>>
    %172 = math.roundeven %171 : f32
    %cst_30 = arith.constant 3.723000e+03 : f32
    %173 = arith.cmpf oeq, %172, %cst_30 : f32
    %cst_31 = arith.constant 8.700000e+02 : f32
    %174 = arith.cmpf oeq, %172, %cst_31 : f32
    %175 = arith.ori %173, %174 : i1
    %c1_i32_32 = arith.constant 1 : i32
    %176 = vector.broadcast %c1_i32_32 : i32 to vector<1x128xi32>
    %177 = arith.cmpi slt, %16, %176 : vector<1x128xi32>
    %c1_i32_33 = arith.constant 1 : i32
    %178 = tpu.dynamic_rotate %170 by %c1_i32_33 dim 1 : vector<1x128xf32>, i32 -> vector<1x128xf32>
    %cst_34 = arith.constant 0.000000e+00 : f32
    %179 = vector.broadcast %cst_34 : f32 to vector<1x128xf32>
    %180 = arith.select %177, %179, %178 : vector<1x128xi1>, vector<1x128xf32>
    %c4_i32_35 = arith.constant 4 : i32
    %181 = vector.broadcast %c4_i32_35 : i32 to vector<1x128xi32>
    %182 = arith.cmpi slt, %16, %181 : vector<1x128xi32>
    %c4_i32_36 = arith.constant 4 : i32
    %183 = tpu.dynamic_rotate %170 by %c4_i32_36 dim 1 : vector<1x128xf32>, i32 -> vector<1x128xf32>
    %cst_37 = arith.constant 0.000000e+00 : f32
    %184 = vector.broadcast %cst_37 : f32 to vector<1x128xf32>
    %185 = arith.select %182, %184, %183 : vector<1x128xi1>, vector<1x128xf32>
    %186 = arith.select %175, %180, %185 : vector<1x128xf32>
    %c0_38 = arith.constant 0 : index
    %c0_39 = arith.constant 0 : index
    %187 = vector.load %arg3[%c0_38, %c0_39] : memref<1x128xf32, #tpu.memory_space<vmem>>, vector<1x128xf32>
    tpu.vector_store %arg3[%c0_38, %c0_39], %186 {strides = array<i32>} : memref<1x128xf32, #tpu.memory_space<vmem>>, vector<1x128xf32>,
    return
  }
}

</mosaic_0001>

<llo_original>
// kernel: tpu_custom_call.1
$region0: #{tpu_custom_call.1}
  #allocation0 [shape = 'u32[]', space=smem, size = 0x4, offset = 0x4, fixed_abs, tag = 'smem constant byte address 0x4 - core index']
  #allocation1 [shape = 'u32[72,128]{1,0:T(1,128)}', space=vmem, size = 0x9000, scoped, tag = 'internal scratch']
  %s0 = inlined_call_operand.hbm [shape: f32[9,128], index: 0, kind: input, shape index: {}]
  %s1 = inlined_call_operand.hbm [shape: f32[130], index: 1, kind: input, shape index: {}]
  %s2 = inlined_call_operand.vmem [shape: f32[15], index: 2, kind: input, shape index: {}]
  %s3 = inlined_call_operand.hbm [shape: f32[1,128], index: 3, kind: output, shape index: {}]
  %s4 = sld [smem:[#allocation0]]
  $region34: #{tpu_custom_call.1} parent=0
    _
  %s6 = ssub.s32 1, %s4
  %s7 = scalar_select 0, %s6, %s4
  $region1: #{tpu_custom_call.1} parent=0
    #allocation2 [shape = 'u8[8192]{0}', space=vmem, size = 0x2000, scoped, tag = 'input window, operand 0, single buffered']
    #allocation3 [shape = 's32[1]{0}', space=sflag, size = 0x4, scoped, tag = 'scoped memory for tpu_custom_call.1']
    #allocation4 [shape = 's32[1]{0}', space=sflag, size = 0x4, scoped, tag = 'scoped memory for tpu_custom_call.1']
    #allocation5 [shape = 's32[1]{0}', space=sflag, size = 0x4, scoped, tag = 'scoped memory for tpu_custom_call.1']
    #allocation6 [shape = 's32[1]{0}', space=sflag, size = 0x4, scoped, tag = 'scoped memory for tpu_custom_call.1']
    #allocation7 [shape = 'u8[1024]{0}', space=smem, size = 0x400, scoped, tag = 'input window, operand 1, single buffered']
    #allocation8 [shape = 'u8[512]{0}', space=smem, size = 0x200, scoped, tag = 'input window, operand 2, single buffered']
    #allocation9 [shape = 'u8[512]{0}', space=vmem, size = 0x400, scoped, tag = 'output window, operand 0, single buffered']
    %8 = vsyncpa [#allocation3], 0
    %9 = vsyncpa [#allocation5], 0
    %10 = vsyncpa [#allocation6], 0
    %11 = vsyncpa [#allocation4], 0
    // Predicated region
    $region2: #{tpu_custom_call.1} parent=1 // pred_check
      _
    $region3: #{tpu_custom_call.1} parent=1 // pred_check_branch
      %13 = sbr.rel (0) target = $region5
    $region4: #{tpu_custom_call.1} parent=1 // pred_region
      %15 = vsyncadd [#allocation3], 0
      %s16 = sshll.u32 %s0, 4
      %s17 = int_to_ptr.hbm [resolvable:$true] %s16
      %s18 = sshll.u32 [#allocation2], 4
      %s19 = int_to_ptr.vmem [resolvable:$true] %s18
      %24 = dma.hbm_to_vmem [thread:$0]  %s17, 256, %s19, [#allocation3], 128, 128, 8
    $region5: #{tpu_custom_call.1} parent=1 // pred_fallthru
      _
    // Predicated region
    $region6: #{tpu_custom_call.1} parent=1 // pred_check
      _
    $region7: #{tpu_custom_call.1} parent=1 // pred_check_branch
      %26 = sbr.rel (0) target = $region9
    $region8: #{tpu_custom_call.1} parent=1 // pred_region
      %28 = vsyncadd [#allocation5], 0
      %s30 = sshll.u32 %s1, 4
      %s31 = int_to_ptr.hbm [resolvable:$true] %s30
      %33 = dma.hbm_to_smem %s31, 32, [#allocation7], [#allocation5]
    $region9: #{tpu_custom_call.1} parent=1 // pred_fallthru
      _
    // Predicated region
    $region10: #{tpu_custom_call.1} parent=1 // pred_check
      _
    $region11: #{tpu_custom_call.1} parent=1 // pred_check_branch
      %35 = sbr.rel (0) target = $region13
    $region12: #{tpu_custom_call.1} parent=1 // pred_region
      %37 = vsyncadd [#allocation6], 0
      %s39 = sshll.u32 %s2, 4
      %s40 = int_to_ptr.vmem [resolvable:$true] %s39
      %42 = dma.vmem_to_smem %s40, 16, [#allocation8], [#allocation6]
    $region13: #{tpu_custom_call.1} parent=1 // pred_fallthru
      _
    // Predicated region
    $region14: #{tpu_custom_call.1} parent=1 // pred_check
      _
    $region15: #{tpu_custom_call.1} parent=1 // pred_check_branch
      %44 = sbr.rel (0) target = $region17
    $region16: #{tpu_custom_call.1} parent=1 // pred_region
      %46 = dma.done [#allocation3], 256
    $region17: #{tpu_custom_call.1} parent=1 // pred_fallthru
      _
    // Predicated region
    $region18: #{tpu_custom_call.1} parent=1 // pred_check
      _
    $region19: #{tpu_custom_call.1} parent=1 // pred_check_branch
      %48 = sbr.rel (0) target = $region21
    $region20: #{tpu_custom_call.1} parent=1 // pred_region
      %50 = dma.done [#allocation5], 32
    $region21: #{tpu_custom_call.1} parent=1 // pred_fallthru
      _
    // Predicated region
    $region22: #{tpu_custom_call.1} parent=1 // pred_check
      _
    $region23: #{tpu_custom_call.1} parent=1 // pred_check_branch
      %52 = sbr.rel (0) target = $region25
    $region24: #{tpu_custom_call.1} parent=1 // pred_region
      %54 = dma.done [#allocation6], 16
    $region25: #{tpu_custom_call.1} parent=1 // pred_fallthru
      _
    %55 = sfence
    %s56 = sld [smem:[#allocation8]]
    %s57 = sld [smem:[#allocation8 + $0x1]]
    %s58 = sld [smem:[#allocation8 + $0x2]]
    %s59 = sld [smem:[#allocation8 + $0x3]]
    %s60 = sld [smem:[#allocation8 + $0x4]]
    %s61 = sld [smem:[#allocation8 + $0x5]]
    %s62 = sld [smem:[#allocation8 + $0x6]]
    %s63 = sld [smem:[#allocation8 + $0x7]]
    %s64 = sld [smem:[#allocation8 + $0x8]]
    %v65 = vld [vmem:[#allocation2] sm:$0xff]
    %v66 = vlaneseq
    %v67 = vand.u32 %v66, 127
    %v69 = vrot.slane %v65, 7
    %v71 = vsub.f32 %v65, %v69
    %s72 = sld [smem:[#allocation7 + $0x80]]
    %s73 = sld [smem:[#allocation7]]
    %s74 = ssub.f32 %s72, %s73
    %p75 = scmp.gt.f32.partialorder %s74, %s63
    %s76 = ssub.f32 %s74, %s63
    %s77 = smul.f32 %s76, %s64
    %s78 = sadd.f32 %s63, %s77
    %s79 = scalar_select %p75, %s78, %s74
    %s80 = sadd.f32 %s79, %s73
    %s81 = ssub.f32 1.0, %s61
    %s82 = smul.f32 %s80, %s81
    %s83 = ssub.f32 %s82, %s62
    %vm84 = vcmp.eq.s32.totalorder %v67, 1
    %v85 = vstv %s83
    %v86 = vsel %vm84, %v85, %v71
    %p87 = scmp.gt.f32.partialorder %s83, %s63
    %s88 = ssub.f32 %s83, %s63
    %s89 = smul.f32 %s88, %s64
    %s90 = sadd.f32 %s63, %s89
    %s91 = scalar_select %p87, %s90, %s83
    %s92 = sld [smem:[#allocation7 + $0x1]]
    %s93 = sadd.f32 %s91, %s92
    %s94 = smul.f32 %s93, %s81
    %s95 = ssub.f32 %s94, %s62
    %vm96 = vcmp.eq.s32.totalorder %v67, 2
    %v97 = vstv %s95
    %v98 = vsel %vm96, %v97, %v86
    %p99 = scmp.gt.f32.partialorder %s95, %s63
    %s100 = ssub.f32 %s95, %s63
    %s101 = smul.f32 %s100, %s64
    %s102 = sadd.f32 %s63, %s101
    %s103 = scalar_select %p99, %s102, %s95
    %s104 = sld [smem:[#allocation7 + $0x2]]
    %s105 = sadd.f32 %s103, %s104
    %s106 = smul.f32 %s105, %s81
    %s107 = ssub.f32 %s106, %s62
    %vm108 = vcmp.eq.s32.totalorder %v67, 3
    %v109 = vstv %s107
    %v110 = vsel %vm108, %v109, %v98
    %p111 = scmp.gt.f32.partialorder %s107, %s63
    %s112 = ssub.f32 %s107, %s63
    %s113 = smul.f32 %s112, %s64
    %s114 = sadd.f32 %s63, %s113
    %s115 = scalar_select %p111, %s114, %s107
    %s116 = sld [smem:[#allocation7 + $0x3]]
    %s117 = sadd.f32 %s115, %s116
    %s118 = smul.f32 %s117, %s81
    %s119 = ssub.f32 %s118, %s62
    %vm120 = vcmp.eq.s32.totalorder %v67, 4
    %v121 = vstv %s119
    %v122 = vsel %vm120, %v121, %v110
    %p123 = scmp.gt.f32.partialorder %s119, %s63
    %s124 = ssub.f32 %s119, %s63
    %s125 = smul.f32 %s124, %s64
    %s126 = sadd.f32 %s63, %s125
    %s127 = scalar_select %p123, %s126, %s119
    %s128 = sld [smem:[#allocation7 + $0x4]]
    %s129 = sadd.f32 %s127, %s128
    %s130 = smul.f32 %s129, %s81
    %s131 = ssub.f32 %s130, %s62
    %vm132 = vcmp.eq.s32.totalorder %v67, 5
    %v133 = vstv %s131
    %v134 = vsel %vm132, %v133, %v122
    %p135 = scmp.gt.f32.partialorder %s131, %s63
    %s136 = ssub.f32 %s131, %s63
    %s137 = smul.f32 %s136, %s64
    %s138 = sadd.f32 %s63, %s137
    %s139 = scalar_select %p135, %s138, %s131
    %s140 = sld [smem:[#allocation7 + $0x5]]
    %s141 = sadd.f32 %s139, %s140
    %s142 = smul.f32 %s141, %s81
    %s143 = ssub.f32 %s142, %s62
    %vm144 = vcmp.eq.s32.totalorder %v67, 6
    %v145 = vstv %s143
    %v146 = vsel %vm144, %v145, %v134
    %p147 = scmp.gt.f32.partialorder %s143, %s63
    %s148 = ssub.f32 %s143, %s63
    %s149 = smul.f32 %s148, %s64
    %s150 = sadd.f32 %s63, %s149
    %s151 = scalar_select %p147, %s150, %s143
    %s152 = sld [smem:[#allocation7 + $0x6]]
    %s153 = sadd.f32 %s151, %s152
    %s154 = smul.f32 %s153, %s81
    %s155 = ssub.f32 %s154, %s62
    %vm156 = vcmp.eq.s32.totalorder %v67, 7
    %v157 = vstv %s155
    %v158 = vsel %vm156, %v157, %v146
    %v159 = vmax.f32 %v158, 0.0
    %v160 = vrot.slane %v65, 3
    %v162 = vmul.f32 %v65, %v160
    %s163 = ssub.f32 %s56, %s57
    %v164 = vstv %s58
    %v165 = vmul.f32 %v164, %v65
    %v166 = vsub.f32 0.0, %v165
    %v167 = vmul.f32 %v166, 1.442695
    %v168 = vpow.pop %v167
    %v169 = vstv %s163
    %v170 = vmul.f32 %v169, %v168
    %v171 = vstv %s57
    %v172 = vadd.f32 %v170, %v171
    %v173 = vmul.f32 %v159, 0.001
    %v175 = vrot.slane %v162, 1
    %v177 = vmul.f32 %v173, %v175
    %v178 = vsub.f32 1.0, %v172
    %v179 = vmul.f32 %v177, %v178
    %v180 = vmax.f32 %v179, 0.0
    %v181 = vrot.slane %v65, 1
    %v183 = vmul.f32 %v65, %v181
    %v184 = vstv %s60
    %v185 = vsub.f32 %v173, %v184
    %v186 = vmax.f32 %v185, 0.0
    %vm187 = vcmp.gt.f32.partialorder %v186, 0.0
    %v188 = vmax.f32 %v186, 1e-30
    %v189 = vlog2.pop %v188
    %v190 = vmul.f32 %v189, 0.6931472
    %v191 = vmul.f32 %v190, 1.6666666
    %v192 = vmul.f32 %v191, 1.442695
    %v193 = vpow.pop %v192
    %v194 = vsel %vm187, %v193, 0.0
    %v195 = vrsqrt.pop %v183
    %v196 = vmul.f32 %v195, %v183
    %v197 = vmul.f32 %v196, %v195
    %v198 = vmul.f32 0.5, %v197
    %v199 = vsub.f32 1.5, %v198
    %v200 = vmul.f32 %v195, %v199
    %v201 = vmul.f32 %v183, %v200
    %vm202 = vcmp.eq.f32.partialorder %v183, inf
    %v203 = vsel %vm202, %v183, %v201
    %vm204 = vcmp.eq.f32.partialorder %v183, 0.0
    %v205 = vand.u32 %v183, 2147483648
    %v206 = vsel %vm204, %v205, %v203
    %v207 = vstv %s59
    %v208 = vrcp.pop %v207
    %v209 = vmul.f32 %v207, %v208
    %v210 = vsub.f32 1.0, %v209
    %v211 = vmul.f32 %v208, %v210
    %v212 = vadd.f32 %v208, %v211
    %vm213 = vweird.f32 %v207
    %vm214 = vweird.f32 %v208
    %vm215 = vmor %vm213, %vm214
    %v216 = vsel %vm215, %v208, %v212
    %v217 = vand.u32 2147483647, %v207
    %vm218 = vcmp.eq.f32.partialorder %v217, 8.507059e+37
    %v219 = vand.u32 %v207, 2147483648
    %v220 = vor.u32 1.1754944e-38, %v219
    %v221 = vsel %vm218, %v220, %v216
    %s222 = vtos %v221
    %s223 = smul.f32 1.49, %s222
    %v224 = vstv %s223
    %v225 = vmul.f32 %v206, %v224
    %v227 = vrot.slane %v194, 5
    %v229 = vmul.f32 %v225, %v227
    %v230 = vrsqrt.pop %v65
    %v231 = vmul.f32 %v230, %v65
    %v232 = vmul.f32 %v231, %v230
    %v233 = vmul.f32 0.5, %v232
    %v234 = vsub.f32 1.5, %v233
    %v235 = vmul.f32 %v230, %v234
    %v236 = vmul.f32 %v65, %v235
    %vm237 = vcmp.eq.f32.partialorder %v65, inf
    %v238 = vsel %vm237, %v65, %v236
    %vm239 = vcmp.eq.f32.partialorder %v65, 0.0
    %v240 = vand.u32 %v65, 2147483648
    %v241 = vsel %vm239, %v240, %v238
    %v243 = vrot.slane %v241, 2
    %v245 = vmul.f32 %v229, %v243
    %v246 = vmax.f32 %v245, 0.0
    %v248 = vrot.slane %v180, 5
    %v250 = vadd.f32 %v246, %v248
    %vm251 = vcmp.lt.s32.totalorder %v67, 8
    %v252 = vsel %vm251, %v250, 0.0
    %s253 = sld [smem:[#allocation7 + $0x81]]
    %s254 = scvt.f32.s32 %s253
    %s255 = scvt.s32.f32 %s254
    %s256 = sand.u32 2147483647, %s255
    %s257 = sand.u32 %s253, 2147483648
    %s258 = sor.u32 %s256, %s257
    %s259 = sand.u32 2147483647, %s253
    %p260 = scmp.lt.f32.partialorder %s259, 2.1474836e+09
    %s261 = scalar_select %p260, %s258, %s253
    %p262 = scmp.eq.f32.partialorder %s261, 3723.0
    %p263 = scmp.eq.f32.partialorder %s261, 870.0
    %p264 = por %p262, %p263
    %vm265 = vcmp.lt.s32.totalorder %v67, 1
    %v267 = vrot.slane %v252, 2
    %269 = vrot.lane.b32.xlu0 %v267, 1
    %v270 = vpop.permute.xlu0 %269
    %v271 = vsel %vm265, 0.0, %v270
    %vm272 = vcmp.lt.s32.totalorder %v67, 4
    %273 = vrot.lane.b32.xlu0 %v267, 4
    %v274 = vpop.permute.xlu0 %273
    %v275 = vsel %vm272, 0.0, %v274
    %s276 = scalar_select %p264, 1, 0
    %v277 = vstv %s276
    %vm278 = vcmp.eq.s32.totalorder %v277, 1
    %v279 = vsel %vm278, %v271, %v275
    %280 = vst [vmem:[#allocation9] sm:$0x1] %v279
    // Predicated region
    $region26: #{tpu_custom_call.1} parent=1 // pred_check
      _
    $region27: #{tpu_custom_call.1} parent=1 // pred_check_branch
      %282 = sbr.rel (0) target = $region29
    $region28: #{tpu_custom_call.1} parent=1 // pred_region
      %284 = vsyncadd [#allocation4], 0
      %s286 = sshll.u32 [#allocation9], 4
      %s287 = int_to_ptr.vmem [resolvable:$true] %s286
      %s288 = sshll.u32 %s3, 4
      %s289 = int_to_ptr.hbm [resolvable:$true] %s288
      %291 = dma.vmem_to_hbm [thread:$0]  %s287, 16, %s289, [#allocation4]
    $region29: #{tpu_custom_call.1} parent=1 // pred_fallthru
      _
    // Predicated region
    $region30: #{tpu_custom_call.1} parent=1 // pred_check
      _
    $region31: #{tpu_custom_call.1} parent=1 // pred_check_branch
      %293 = sbr.rel (0) target = $region33
    $region32: #{tpu_custom_call.1} parent=1 // pred_region
      %295 = dma.done [#allocation4], 16
    $region33: #{tpu_custom_call.1} parent=1 // pred_fallthru
      _
    %296 = vsyncpa [#allocation3], 1
    %297 = vsyncpa [#allocation4], 1
    %298 = vsyncpa [#allocation5], 1
    %299 = vsyncpa [#allocation6], 1

</llo_original>
